<compile_context>
chip_gen: v5e
topology: v5e:2x2
jax: 0.10.0
libtpu: 0.0.40
codegen_flags: <defaults>
</compile_context>

<pallas_src>
import functools

import jax
import jax.numpy as jnp
from jax.experimental import pallas as pl
from jax.experimental.pallas import tpu as pltpu


def _round_up(x, m):
    return ((x + m - 1) // m) * m


def _largest_tile(dim, candidates):
    """Largest candidate that divides `dim` (candidates sorted descending).

    `dim` is always a multiple of the smallest candidate here, so this never
    degenerates below a full-lane/sublane tile.
    """
    for c in candidates:
        if dim % c == 0:
            return c
    return candidates[-1]


def _linear_bias_kernel(x_ref, w_ref, b_ref, o_ref):
    # Grid = (M-tiles, N-tiles, K-tiles); K is the reduction axis (last, "arbitrary").
    # The output block's index_map ignores k, so o_ref stays resident in VMEM across
    # the whole K loop and acts as the f32 accumulator (no scratch needed).
    k = pl.program_id(2)

    @pl.when(k == 0)
    def _():
        o_ref[...] = jnp.broadcast_to(b_ref[...], o_ref.shape)

    o_ref[...] += jnp.dot(
        x_ref[...], w_ref[...], preferred_element_type=jnp.float32
    )


@functools.partial(jax.jit, static_argnames=("n_out",))
def linear_pallas(x2d, wp, bp, *, n_out):
    """y = x2d @ wp[:, :n_out] + bp[:, :n_out].

    x2d: (M, K) f32/bf16 activations (unpadded).
    wp : (K_pad, N_pad) bf16 weight, zero-padded along K and N, padded once at init.
    bp : (1, N_pad) f32 bias, zero-padded along N.
    Returns (M, n_out) f32.
    """
    M, K = x2d.shape
    K_pad, N_pad = wp.shape

    # --- activations: cast to bf16; pad K only when it isn't already 128-aligned -----
    x2d = x2d.astype(jnp.bfloat16)
    if K_pad != K:
        x2d = jnp.pad(x2d, ((0, 0), (0, K_pad - K)))

    # --- tile selection: fixed large tiles + cdiv grid --------------------------------
    tm = min(512, _round_up(M, 8))                       # sublane-aligned, ragged-M ok
    tk = _largest_tile(K_pad, (1024, 512, 256, 128))     # divides K_pad exactly
    tn = _largest_tile(N_pad, (512, 256, 128))           # divides N_pad exactly

    grid_m = pl.cdiv(M, tm)
    # v7x has 2 TensorCores: if M gives a single parallel block, try to split N.
    if grid_m == 1 and (N_pad // tn) < 2 and tn >= 256 and N_pad % (tn // 2) == 0:
        tn //= 2
    grid_n = pl.cdiv(n_out, tn)
    grid_k = K_pad // tk
    grid = (grid_m, grid_n, grid_k)

    # --- VMEM budget (double-buffered bf16 x/w tiles, f32 bias + output block) --------
    vmem_need = (
        2 * tm * tk * 2          # x tiles (bf16)
        + 2 * tk * tn * 2        # w tiles (bf16)
        + 2 * 1 * tn * 4         # bias tiles (f32)
        + 2 * tm * tn * 4        # output / accumulator block (f32)
    )
    vmem_limit = int(min(40 * 1024 * 1024, max(2 * vmem_need, 16 * 1024 * 1024)))

    # Advisory cost: x is re-streamed once per N block, w once per M block.
    cost = pl.CostEstimate(
        flops=2 * M * K_pad * (grid_n * tn),
        transcendentals=0,
        bytes_accessed=(
            M * K_pad * 2 * grid_n
            + K_pad * (grid_n * tn) * 2 * grid_m
            + N_pad * 4
            + M * n_out * 4
        ),
    )

    return pl.pallas_call(
        _linear_bias_kernel,
        out_shape=jax.ShapeDtypeStruct((M, n_out), jnp.float32),
        grid_spec=pltpu.PrefetchScalarGridSpec(
            num_scalar_prefetch=0,
            grid=grid,
            in_specs=[
                pl.BlockSpec((tm, tk), lambda i, j, k: (i, k)),   # x tile (bf16)
                pl.BlockSpec((tk, tn), lambda i, j, k: (k, j)),   # w tile (bf16)
                pl.BlockSpec((1, tn), lambda i, j, k: (0, j)),    # bias tile (f32)
            ],
            out_specs=pl.BlockSpec((tm, tn), lambda i, j, k: (i, j)),
        ),
        compiler_params=pltpu.CompilerParams(
            dimension_semantics=("parallel", "parallel", "arbitrary"),
            vmem_limit_bytes=vmem_limit,
        ),
        cost_estimate=cost,
    )(x2d, wp, bp)


def kaiming_normal(key, shape, fan_in, a=0.0):
    # nn.init.kaiming_normal_(mode='fan_in', nonlinearity='leaky_relu'), default a=0.
    gain = jnp.sqrt(2.0 / (1.0 + a * a))
    std = gain / jnp.sqrt(jnp.asarray(fan_in, jnp.float32))
    return std * jax.random.normal(key, shape, dtype=jnp.float32)


class PatchEmbedding1D:
    """JAX/Pallas port of Patch_embedding_1d."""

    def __init__(self, embed_dim, input_original_shape, act="normal", key=None):
        self.act = act
        self.embed_dim = embed_dim
        self.input_original_shape = input_original_shape
        C, H, W = input_original_shape
        hw = H * W
        key = key if key is not None else jax.random.PRNGKey(0)
        if act == "normal":
            in_f, out_f = hw, embed_dim
        elif act == "inverse":
            in_f, out_f = embed_dim, hw
        else:
            raise ValueError(act)

        # PyTorch Linear weight is (out_f, in_f); fan_in = in_f. Keep (in_f, out_f).
        w_torch_layout = kaiming_normal(key, (out_f, in_f), fan_in=in_f)
        self.w = jnp.transpose(w_torch_layout)            # (in_f, out_f), f32 reference
        self.b = jnp.zeros((out_f,), jnp.float32)          # zeros_ init

        # Pad + cast ONCE at init (zero pad along K and N; pads contribute nothing).
        k_pad = _round_up(in_f, 128)
        n_pad = _round_up(out_f, 128)
        wp = jnp.pad(self.w, ((0, k_pad - in_f), (0, n_pad - out_f)))
        self.wp = wp.astype(jnp.bfloat16)                  # (K_pad, N_pad) bf16
        self.bp = jnp.pad(self.b, (0, n_pad - out_f)).reshape(1, n_pad)  # (1, N_pad) f32
        self._in_f = in_f
        self._out_f = out_f

    def __call__(self, x):
        if self.act == "normal":
            B, C, H, W = x.shape
            x2d = x.reshape(B * C, H * W)                  # view(B, L, -1) flattened
            y2d = linear_pallas(x2d, self.wp, self.bp, n_out=self._out_f)
            return y2d.reshape(B, C, self.embed_dim)
        elif self.act == "inverse":
            C, H, W = self.input_original_shape
            B, L, E = x.shape
            x2d = x.reshape(B * L, E)
            y2d = linear_pallas(x2d, self.wp, self.bp, n_out=self._out_f)
            return y2d.reshape(B, C, H, W)


if __name__ == "__main__":
    key = jax.random.PRNGKey(0)
    k_x, k_w, k_xi, k_x2, k_w2 = jax.random.split(key, 5)

    # Small shapes consistent with the module: batch=2, channels=4, H=W=16, embed_dim=32.
    B, C, H, W = 2, 4, 16, 16
    embed_dim = 32
    x = jax.random.normal(k_x, (B, C, H, W), dtype=jnp.float32)

    # --- normal path ---
    mod = PatchEmbedding1D(embed_dim, (C, H, W), act="normal", key=k_w)
    y = jax.block_until_ready(mod(x))
    assert y.shape == (B, C, embed_dim), y.shape
    x_flat = x.reshape(B, C, H * W)
    y_ref_bf16 = jnp.dot(x_flat.astype(jnp.bfloat16), mod.w.astype(jnp.bfloat16),
                         preferred_element_type=jnp.float32) + mod.b
    y_ref_f32 = x_flat @ mod.w + mod.b
    assert jnp.allclose(y, y_ref_bf16, atol=5e-3, rtol=5e-3)
    assert jnp.allclose(y, y_ref_f32, atol=5e-2, rtol=5e-2)

    # --- inverse path ---
    mod_inv = PatchEmbedding1D(embed_dim, (C, H, W), act="inverse", key=k_w)
    xe = jax.random.normal(k_xi, (B, C, embed_dim), dtype=jnp.float32)
    z = jax.block_until_ready(mod_inv(xe))
    assert z.shape == (B, C, H, W), z.shape
    z_ref_bf16 = (jnp.dot(xe.reshape(B * C, embed_dim).astype(jnp.bfloat16),
                          mod_inv.w.astype(jnp.bfloat16),
                          preferred_element_type=jnp.float32)
                  + mod_inv.b).reshape(B, C, H, W)
    z_ref_f32 = (xe.reshape(B * C, embed_dim) @ mod_inv.w + mod_inv.b).reshape(B, C, H, W)
    assert jnp.allclose(z, z_ref_bf16, atol=5e-3, rtol=5e-3)
    assert jnp.allclose(z, z_ref_f32, atol=5e-2, rtol=5e-2)

    # --- extra correctness check: non-aligned shapes exercise the ragged/pad paths ---
    B2, C2, H2, W2, E2 = 3, 5, 10, 10, 48
    x_odd = jax.random.normal(k_x2, (B2, C2, H2, W2), dtype=jnp.float32)
    mod_odd = PatchEmbedding1D(E2, (C2, H2, W2), act="normal", key=k_w2)
    y_odd = jax.block_until_ready(mod_odd(x_odd))
    assert y_odd.shape == (B2, C2, E2), y_odd.shape
    x_odd_flat = x_odd.reshape(B2, C2, H2 * W2)
    y_odd_ref_bf16 = jnp.dot(x_odd_flat.astype(jnp.bfloat16),
                             mod_odd.w.astype(jnp.bfloat16),
                             preferred_element_type=jnp.float32) + mod_odd.b
    y_odd_ref_f32 = x_odd_flat @ mod_odd.w + mod_odd.b
    assert jnp.allclose(y_odd, y_odd_ref_bf16, atol=5e-3, rtol=5e-3)
    assert jnp.allclose(y_odd, y_odd_ref_f32, atol=5e-2, rtol=5e-2)

    print("KERNEL_OK")
</pallas_src>

<mosaic_0001>
module attributes {stable_mosaic.version = 11 : i64} {
  func.func @_linear_bias_kernel(%arg0: i32, %arg1: i32, %arg2: i32, %arg3: memref<8x256xbf16, #tpu.memory_space<vmem>>, %arg4: memref<256x128xbf16, #tpu.memory_space<vmem>>, %arg5: memref<1x128xf32, #tpu.memory_space<vmem>>, %arg6: memref<8x128xf32, #tpu.memory_space<vmem>>) attributes {dimension_semantics = [#tpu.dimension_semantics<parallel>, #tpu.dimension_semantics<parallel>, #tpu.dimension_semantics<arbitrary>], iteration_bounds = array<i64: 1, 1, 1>, scalar_prefetch = 0 : i64, scratch_operands = 0 : i64, tpu.core_type = #tpu.core_type<tc>, window_params = [{transform_indices = @transform_0, window_bounds = array<i64: 8, 256>}, {transform_indices = @transform_1, window_bounds = array<i64: 256, 128>}, {transform_indices = @transform_2, window_bounds = array<i64: 1, 128>}, {transform_indices = @transform_3, window_bounds = array<i64: 8, 128>}]} {
    %c0_i32 = arith.constant 0 : i32
    %0 = arith.cmpi eq, %arg2, %c0_i32 : i32
    %1 = arith.extui %0 : i1 to i32
    %c0_i32_0 = arith.constant 0 : i32
    %2 = arith.cmpi ne, %1, %c0_i32_0 : i32
    scf.if %2 {
      %c0_8 = arith.constant 0 : index
      %c0_9 = arith.constant 0 : index
      %9 = vector.load %arg5[%c0_8, %c0_9] : memref<1x128xf32, #tpu.memory_space<vmem>>, vector<1x128xf32>
      %10 = vector.shape_cast %9 : vector<1x128xf32> to vector<1x128xf32>
      %11 = vector.broadcast %10 : vector<1x128xf32> to vector<8x128xf32>
      %c0_10 = arith.constant 0 : index
      %c0_11 = arith.constant 0 : index
      %12 = vector.load %arg6[%c0_10, %c0_11] : memref<8x128xf32, #tpu.memory_space<vmem>>, vector<8x128xf32>
      tpu.vector_store %arg6[%c0_10, %c0_11], %11 {strides = array<i32>} : memref<8x128xf32, #tpu.memory_space<vmem>>, vector<8x128xf32>,
    } else {
    }
    %c0 = arith.constant 0 : index
    %c0_1 = arith.constant 0 : index
    %3 = vector.load %arg6[%c0, %c0_1] : memref<8x128xf32, #tpu.memory_space<vmem>>, vector<8x128xf32>
    %c0_2 = arith.constant 0 : index
    %c0_3 = arith.constant 0 : index
    %4 = vector.load %arg3[%c0_2, %c0_3] : memref<8x256xbf16, #tpu.memory_space<vmem>>, vector<8x256xbf16>
    %c0_4 = arith.constant 0 : index
    %c0_5 = arith.constant 0 : index
    %5 = vector.load %arg4[%c0_4, %c0_5] : memref<256x128xbf16, #tpu.memory_space<vmem>>, vector<256x128xbf16>
    %cst = arith.constant dense<0.000000e+00> : vector<8x128xf32>
    %6 = tpu.matmul %4, %5, %cst {dimension_numbers = #tpu.dot_dimension_numbers<[1], [0], [0], [1], [0, 0, 1, 1], [], []>} : vector<8x256xbf16>, vector<256x128xbf16>, vector<8x128xf32> -> vector<8x128xf32>
    %7 = arith.addf %3, %6 : vector<8x128xf32>
    %c0_6 = arith.constant 0 : index
    %c0_7 = arith.constant 0 : index
    %8 = vector.load %arg6[%c0_6, %c0_7] : memref<8x128xf32, #tpu.memory_space<vmem>>, vector<8x128xf32>
    tpu.vector_store %arg6[%c0_6, %c0_7], %7 {strides = array<i32>} : memref<8x128xf32, #tpu.memory_space<vmem>>, vector<8x128xf32>,
    return
  }
  func.func @transform_0(%arg0: i32, %arg1: i32, %arg2: i32) -> (i32, i32) {
    %c0_i32 = arith.constant 0 : i32
    return %arg0, %arg2 : i32, i32
  }
  func.func @transform_1(%arg0: i32, %arg1: i32, %arg2: i32) -> (i32, i32) {
    %c0_i32 = arith.constant 0 : i32
    return %arg2, %arg1 : i32, i32
  }
  func.func @transform_2(%arg0: i32, %arg1: i32, %arg2: i32) -> (i32, i32) {
    %c0_i32 = arith.constant 0 : i32
    %c0_i32_0 = arith.constant 0 : i32
    return %c0_i32, %arg1 : i32, i32
  }
  func.func @transform_3(%arg0: i32, %arg1: i32, %arg2: i32) -> (i32, i32) {
    %c0_i32 = arith.constant 0 : i32
    return %arg0, %arg1 : i32, i32
  }
}

</mosaic_0001>

<llo_original>
// kernel: linear_pallas.1
$region0: #{linear_pallas.1}
  #allocation0 [shape = 'u32[]', space=smem, size = 0x4, offset = 0x4, fixed_abs, tag = 'smem constant byte address 0x4 - core index']
  #allocation1 [shape = 'u32[72,128]{1,0:T(1,128)}', space=vmem, size = 0x9000, scoped, tag = 'internal scratch']
  %s0 = inlined_call_operand.vmem [shape: bf16[8,256], index: 0, kind: input, shape index: {}]
  %s1 = inlined_call_operand.hbm [shape: bf16[256,128], index: 1, kind: input, shape index: {}]
  %s2 = inlined_call_operand.vmem [shape: f32[1,128], index: 2, kind: input, shape index: {}]
  %s3 = inlined_call_operand.hbm [shape: f32[8,32], index: 3, kind: output, shape index: {}]
  %s4 = sld [smem:[#allocation0]]
  $region30: #{linear_pallas.1} parent=0
    _
  %s6 = ssub.s32 1, %s4
  %s7 = scalar_select 0, %s6, %s4
  $region1: #{linear_pallas.1} parent=0
    #allocation2 [shape = 'u8[65536]{0}', space=vmem, size = 0x10000, scoped, tag = 'input window, operand 1, single buffered']
    #allocation3 [shape = 's32[1]{0}', space=sflag, size = 0x4, scoped, tag = 'scoped memory for linear_pallas.1']
    #allocation4 [shape = 's32[1]{0}', space=sflag, size = 0x4, scoped, tag = 'scoped memory for linear_pallas.1']
    #allocation5 [shape = 'u8[4096]{0}', space=vmem, size = 0x1000, scoped, tag = 'output window, operand 0, single buffered']
    %8 = vsyncpa [#allocation3], 0
    %9 = vsyncpa [#allocation4], 0
    // Predicated region
    $region2: #{linear_pallas.1} parent=1 // pred_check
      _
    $region3: #{linear_pallas.1} parent=1 // pred_check_branch
      %11 = sbr.rel (0) target = $region5
    $region4: #{linear_pallas.1} parent=1 // pred_region
      _
    $region5: #{linear_pallas.1} parent=1 // pred_fallthru
      _
    // Predicated region
    $region6: #{linear_pallas.1} parent=1 // pred_check
      _
    $region7: #{linear_pallas.1} parent=1 // pred_check_branch
      %13 = sbr.rel (0) target = $region9
    $region8: #{linear_pallas.1} parent=1 // pred_region
      %15 = vsyncadd [#allocation3], 0
      %s16 = sshll.u32 %s1, 4
      %s17 = int_to_ptr.hbm [resolvable:$true] %s16
      %s18 = sshll.u32 [#allocation2], 4
      %s19 = int_to_ptr.vmem [resolvable:$true] %s18
      %24 = dma.hbm_to_vmem [thread:$0]  %s17, 2048, %s19, [#allocation3], 64, 64, 4
    $region9: #{linear_pallas.1} parent=1 // pred_fallthru
      _
    // Predicated region
    $region10: #{linear_pallas.1} parent=1 // pred_check
      _
    $region11: #{linear_pallas.1} parent=1 // pred_check_branch
      %26 = sbr.rel (0) target = $region13
    $region12: #{linear_pallas.1} parent=1 // pred_region
      _
    $region13: #{linear_pallas.1} parent=1 // pred_fallthru
      _
    // Predicated region
    $region14: #{linear_pallas.1} parent=1 // pred_check
      _
    $region15: #{linear_pallas.1} parent=1 // pred_check_branch
      %28 = sbr.rel (0) target = $region17
    $region16: #{linear_pallas.1} parent=1 // pred_region
      %30 = dma.done [#allocation3], 2048
    $region17: #{linear_pallas.1} parent=1 // pred_fallthru
      _
    %p31 = scmp.eq.s32.totalorder 0, 0
    // Predicated region
    $region18: #{linear_pallas.1} parent=1 // pred_check
      %p32 = pneg %p31
    $region19: #{linear_pallas.1} parent=1 // pred_check_branch
      %34 = sbr.rel (%p32) target = $region21
    $region20: #{linear_pallas.1} parent=1 // pred_region
      %v35 = vld [vmem:[%s2] sm:$0x1]
      %v37 = vperm.slane %v35, 0
      %39 = vst [vmem:[#allocation5] sm:$0xff] %v37
    $region21: #{linear_pallas.1} parent=1 // pred_fallthru
      _
    %v40 = vld [vmem:[#allocation5] sm:$0xff]
    %v41 = vld [vmem:[%s0] sm:$0xff]
    %v42 = vld [vmem:[#allocation2] sm:$0xf]
    %v43 = vld [vmem:[#allocation2 + $0x4] sm:$0xf]
    %v44 = vld [vmem:[#allocation2 + $0x8] sm:$0xf]
    %v45 = vld [vmem:[#allocation2 + $0xc] sm:$0xf]
    %v46 = vld [vmem:[#allocation2 + $0x10] sm:$0xf]
    %v47 = vld [vmem:[#allocation2 + $0x14] sm:$0xf]
    %v48 = vld [vmem:[#allocation2 + $0x18] sm:$0xf]
    %v49 = vld [vmem:[#allocation2 + $0x1c] sm:$0xf]
    %v50 = vld [vmem:[#allocation2 + $0x20] sm:$0xf]
    %v51 = vld [vmem:[#allocation2 + $0x24] sm:$0xf]
    %v52 = vld [vmem:[#allocation2 + $0x28] sm:$0xf]
    %v53 = vld [vmem:[#allocation2 + $0x2c] sm:$0xf]
    %v54 = vld [vmem:[#allocation2 + $0x30] sm:$0xf]
    %v55 = vld [vmem:[#allocation2 + $0x34] sm:$0xf]
    %v56 = vld [vmem:[#allocation2 + $0x38] sm:$0xf]
    %v57 = vld [vmem:[#allocation2 + $0x3c] sm:$0xf]
    %v58 = vld [vmem:[#allocation2 + $0x40] sm:$0xf]
    %v59 = vld [vmem:[#allocation2 + $0x44] sm:$0xf]
    %v60 = vld [vmem:[#allocation2 + $0x48] sm:$0xf]
    %v61 = vld [vmem:[#allocation2 + $0x4c] sm:$0xf]
    %v62 = vld [vmem:[#allocation2 + $0x50] sm:$0xf]
    %v63 = vld [vmem:[#allocation2 + $0x54] sm:$0xf]
    %v64 = vld [vmem:[#allocation2 + $0x58] sm:$0xf]
    %v65 = vld [vmem:[#allocation2 + $0x5c] sm:$0xf]
    %v66 = vld [vmem:[#allocation2 + $0x60] sm:$0xf]
    %v67 = vld [vmem:[#allocation2 + $0x64] sm:$0xf]
    %v68 = vld [vmem:[#allocation2 + $0x68] sm:$0xf]
    %v69 = vld [vmem:[#allocation2 + $0x6c] sm:$0xf]
    %v70 = vld [vmem:[#allocation2 + $0x70] sm:$0xf]
    %v71 = vld [vmem:[#allocation2 + $0x74] sm:$0xf]
    %v72 = vld [vmem:[#allocation2 + $0x78] sm:$0xf]
    %v73 = vld [vmem:[#allocation2 + $0x7c] sm:$0xf]
    %v75 = vunpack.c.l.b16 %v41
    %v76 = vunpack.c.h.b16 %v41
    %v77 = vpack.c.b16 %v75, %v75
    %v78 = vpack.c.b16 %v76, %v76
    %v113 = vunpack.c.l.b16 %v42
    %v114 = vunpack.c.l.b16 %v43
    %v115 = vunpack.c.l.b16 %v44
    %v116 = vunpack.c.l.b16 %v45
    %v117 = vunpack.c.l.b16 %v46
    %v118 = vunpack.c.l.b16 %v47
    %v119 = vunpack.c.l.b16 %v48
    %v120 = vunpack.c.l.b16 %v49
    %v121 = vunpack.c.l.b16 %v50
    %v122 = vunpack.c.l.b16 %v51
    %v123 = vunpack.c.l.b16 %v52
    %v124 = vunpack.c.l.b16 %v53
    %v125 = vunpack.c.l.b16 %v54
    %v126 = vunpack.c.l.b16 %v55
    %v127 = vunpack.c.l.b16 %v56
    %v128 = vunpack.c.l.b16 %v57
    %v129 = vunpack.c.l.b16 %v58
    %v130 = vunpack.c.l.b16 %v59
    %v131 = vunpack.c.l.b16 %v60
    %v132 = vunpack.c.l.b16 %v61
    %v133 = vunpack.c.l.b16 %v62
    %v134 = vunpack.c.l.b16 %v63
    %v135 = vunpack.c.l.b16 %v64
    %v136 = vunpack.c.l.b16 %v65
    %v137 = vunpack.c.l.b16 %v66
    %v138 = vunpack.c.l.b16 %v67
    %v139 = vunpack.c.l.b16 %v68
    %v140 = vunpack.c.l.b16 %v69
    %v141 = vunpack.c.l.b16 %v70
    %v142 = vunpack.c.l.b16 %v71
    %v143 = vunpack.c.l.b16 %v72
    %v144 = vunpack.c.l.b16 %v73
    %v145 = vpack.c.b16 %v114, %v113
    %v146 = vpack.c.b16 %v116, %v115
    %v147 = vpack.c.b16 %v118, %v117
    %v148 = vpack.c.b16 %v120, %v119
    %v149 = vpack.c.b16 %v122, %v121
    %v150 = vpack.c.b16 %v124, %v123
    %v151 = vpack.c.b16 %v126, %v125
    %v152 = vpack.c.b16 %v128, %v127
    %v153 = vpack.c.b16 %v130, %v129
    %v154 = vpack.c.b16 %v132, %v131
    %v155 = vpack.c.b16 %v134, %v133
    %v156 = vpack.c.b16 %v136, %v135
    %v157 = vpack.c.b16 %v138, %v137
    %v158 = vpack.c.b16 %v140, %v139
    %v159 = vpack.c.b16 %v142, %v141
    %v160 = vpack.c.b16 %v144, %v143
    %177 = vmatpush.bf16.msra.mxu0 %v152
    %178 = vmatpush.bf16.msra.mxu0 %v151
    %179 = vmatpush.bf16.msra.mxu0 %v150
    %180 = vmatpush.bf16.msra.mxu0 %v149
    %181 = vmatpush.bf16.msra.mxu0 %v148
    %182 = vmatpush.bf16.msra.mxu0 %v147
    %183 = vmatpush.bf16.msra.mxu0 %v146
    %184 = vmatpush.bf16.msra.mxu0 %v145
    %185 = vmatmul.bf16.gmra.mxu0 %v77
    %v186 = vpop.f32.mrf.mxu0
    %v187 = vadd.f32 0.0, %v186
    %v188 = vpop.f32.mrf.mxu0
    %189 = vdwg.mxu0
    %190 = vmatpush.bf16.msra.mxu0 %v160
    %191 = vmatpush.bf16.msra.mxu0 %v159
    %192 = vmatpush.bf16.msra.mxu0 %v158
    %193 = vmatpush.bf16.msra.mxu0 %v157
    %194 = vmatpush.bf16.msra.mxu0 %v156
    %195 = vmatpush.bf16.msra.mxu0 %v155
    %196 = vmatpush.bf16.msra.mxu0 %v154
    %197 = vmatpush.bf16.msra.mxu0 %v153
    %198 = vmatmul.bf16.gmra.mxu0 %v78
    %v199 = vpop.f32.mrf.mxu0
    %v200 = vadd.f32 %v187, %v199
    %v201 = vpop.f32.mrf.mxu0
    %202 = vdwg.mxu0
    %v203 = vadd.f32 %v40, %v200
    %204 = vst [vmem:[#allocation5] sm:$0xff] %v203
    // Predicated region
    $region22: #{linear_pallas.1} parent=1 // pred_check
      _
    $region23: #{linear_pallas.1} parent=1 // pred_check_branch
      %206 = sbr.rel (0) target = $region25
    $region24: #{linear_pallas.1} parent=1 // pred_region
      %208 = vsyncadd [#allocation4], 0
      %s210 = sshll.u32 [#allocation5], 4
      %s211 = int_to_ptr.vmem [resolvable:$true] %s210
      %s212 = sshll.u32 %s3, 4
      %s213 = int_to_ptr.hbm [resolvable:$true] %s212
      %215 = dma.vmem_to_hbm [thread:$0]  %s211, 128, %s213, [#allocation4]
    $region25: #{linear_pallas.1} parent=1 // pred_fallthru
      _
    // Predicated region
    $region26: #{linear_pallas.1} parent=1 // pred_check
      _
    $region27: #{linear_pallas.1} parent=1 // pred_check_branch
      %217 = sbr.rel (0) target = $region29
    $region28: #{linear_pallas.1} parent=1 // pred_region
      %219 = dma.done [#allocation4], 128
    $region29: #{linear_pallas.1} parent=1 // pred_fallthru
      _
    %220 = vsyncpa [#allocation3], 1
    %221 = vsyncpa [#allocation4], 1

</llo_original>
